<compile_context>
chip_gen: v7x
topology: tpu7x:2x2x1
jax: 0.10.0
libtpu: 0.0.40
codegen_flags: <defaults>
</compile_context>

<pallas_src>
import functools

import jax
import jax.numpy as jnp
from jax.experimental import pallas as pl
from jax.experimental.pallas import tpu as pltpu


# --------------------------------------------------------------------------- #
# small helpers
# --------------------------------------------------------------------------- #
def _round_up(x, m):
    return ((x + m - 1) // m) * m


def _lane_pad(h):
    # Small hidden dims stay unpadded: a full-extent last dim is a legal block and
    # padding would inflate x/out HBM traffic (4x for H=32).  Larger H is padded
    # to a lane-dense multiple of 128 so stores are unmasked full `vst`s.
    return h if h <= 128 else _round_up(h, 128)


def _vmem_budget_bytes():
    """~85% of this chip's physical VMEM (v7x ~54 MiB, v5e/v6e ~109 MiB)."""
    cap = 64 << 20  # conservative fallback = smallest generation (v7x)
    try:
        info = pltpu.get_tpu_info()
        c = getattr(info, "vmem_capacity_bytes", None)
        if c:
            cap = int(c)
    except Exception:  # best-effort hardware query only; never masks kernel errors
        pass
    return int(cap * 0.85)


@functools.lru_cache(maxsize=1)
def _single_buffer_supported():
    """Probe once whether BlockSpec(pipeline_mode=pl.Buffered(1)) lowers/runs here.

    Only this tiny probe uses a broad except; the real kernel below never catches
    exceptions, so genuine Mosaic lowering / VMEM errors are not masked.
    """
    if not hasattr(pl, "Buffered"):
        return False

    def _copy(x_ref, o_ref):
        o_ref[...] = x_ref[...]

    try:
        spec = pl.BlockSpec((8, 128), lambda i: (0, 0),
                            pipeline_mode=pl.Buffered(buffer_count=1))
        out = pl.pallas_call(
            _copy,
            out_shape=jax.ShapeDtypeStruct((8, 128), jnp.float32),
            grid=(1,),
            in_specs=[spec],
            out_specs=pl.BlockSpec((8, 128), lambda i: (0, 0)),
        )(jnp.zeros((8, 128), jnp.float32))
        jax.block_until_ready(out)
        return True
    except Exception:
        return False


def _pick_tile_m(n_rows, hp):
    """Adaptive, divisor-friendly row tile.

    Targets a ~4 MiB f32 x-tile, keeps row-padding waste under ~10% when possible,
    and (for v7x's 2 TensorCores) prefers >=2 grid steps along the parallel axis.
    """
    budget_rows = max(8, (4 << 20) // max(1, hp * 4))
    candidates = (1024, 512, 256, 128, 64, 32, 16, 8)
    best = 8
    for t in candidates:
        if t > budget_rows:
            continue
        pad = _round_up(n_rows, t) - n_rows
        if n_rows >= t and pad * 10 <= n_rows:
            best = t
            break
    else:
        for t in candidates:
            if t <= budget_rows and t <= _round_up(n_rows, 8):
                best = t
                break
    # give the 'parallel' row axis at least 2 steps when the input allows it
    while best > 8 and _round_up(n_rows, best) // best < 2:
        best //= 2
    return best


# --------------------------------------------------------------------------- #
# kernels
# --------------------------------------------------------------------------- #
def _residual_block_resident_kernel(x_ref, w_ref, b_ref, o_ref, *, n_layers, mxu_dtype):
    # x_ref : (TM, Hp)      input row tile
    # w_ref : (L, Hp, Hp)   stacked weights, (in, out) layout, VMEM-resident
    # b_ref : (L, 1, Hp)    stacked biases (f32)
    # o_ref : (TM, Hp)
    h = x_ref[...].astype(jnp.float32)
    for l in range(n_layers):                       # L is small & static -> unrolled
        h = jnp.dot(h.astype(mxu_dtype), w_ref[l],
                    preferred_element_type=jnp.float32)
        h = jnp.maximum(h + b_ref[l], 0.0)          # bias + ReLU in f32 on the VPU
    # residual: re-read the VMEM-resident x tile (short live range, no extra copy)
    o_ref[...] = (x_ref[...].astype(jnp.float32) + h).astype(o_ref.dtype)


def _residual_block_streamed_kernel(x_ref, w_ref, b_ref, o_ref, h_ref, *, mxu_dtype):
    # grid = (row_tiles, L); layer axis is 'arbitrary' (sequential carry in h_ref)
    # x_ref : (TM, Hp)      same block for every layer step (not re-fetched)
    # w_ref : (1, Hp, Hp)   weights of layer l only (streamed per grid step)
    # b_ref : (1, 1, Hp)
    # o_ref : (TM, Hp)      written only at the last layer
    # h_ref : VMEM scratch (TM, Hp) f32 carried across the layer axis
    l = pl.program_id(1)

    @pl.when(l == 0)
    def _():
        h_ref[...] = x_ref[...].astype(jnp.float32)

    h = jnp.dot(h_ref[...].astype(mxu_dtype), w_ref[0],
                preferred_element_type=jnp.float32)
    h_ref[...] = jnp.maximum(h + b_ref[0], 0.0)

    @pl.when(l == pl.num_programs(1) - 1)
    def _():
        o_ref[...] = (x_ref[...].astype(jnp.float32) + h_ref[...]).astype(o_ref.dtype)


# --------------------------------------------------------------------------- #
# parameter prepack (one-time; hoisted out of the forward path)
# --------------------------------------------------------------------------- #
def prepack_params(weights, biases, *, mxu_dtype=jnp.float32):
    """One-time conversion of PyTorch-layout parameters to the kernel layout.

    weights : (L, H, H) in nn.Linear (out, in) layout.
    biases  : (L, H).
    mxu_dtype: dtype fed to the MXU.  f32 matches PyTorch; jnp.bfloat16 is an
               explicit opt-in fast path (accumulation/bias/ReLU stay f32).
    Returns (w_packed, b_packed) with shapes (L, Hp, Hp) and (L, 1, Hp).
    """
    L, H, H2 = weights.shape
    assert H == H2, "ResidualBlock weights must be square (H, H)"
    hp = _lane_pad(H)
    w = jnp.transpose(weights, (0, 2, 1))                         # (L, in, out)
    w = jnp.pad(w, ((0, 0), (0, hp - H), (0, hp - H))).astype(mxu_dtype)
    b = jnp.pad(biases, ((0, 0), (0, hp - H))).reshape(L, 1, hp).astype(jnp.float32)
    return w, b


# --------------------------------------------------------------------------- #
# forward
# --------------------------------------------------------------------------- #
def residual_block(x, w_packed, b_packed, *, max_resident_weight_bytes=None):
    """ResidualBlock forward: x + denses(x).

    x        : (..., H)
    w_packed : (L, Hp, Hp) from prepack_params
    b_packed : (L, 1, Hp)  from prepack_params
    max_resident_weight_bytes: optional override of the VMEM-resident weight
        budget (mainly for testing the streamed path).
    """
    H = x.shape[-1]
    if w_packed.ndim != 3 or w_packed.shape[1] != w_packed.shape[2]:
        raise ValueError("w_packed must be (L, Hp, Hp); use prepack_params()")
    L, Hp, _ = w_packed.shape
    if Hp != _lane_pad(H):
        raise ValueError(f"w_packed (Hp={Hp}) was not prepacked for hidden_dim={H}")
    if b_packed.shape != (L, 1, Hp):
        raise ValueError("b_packed must be (L, 1, Hp); use prepack_params()")

    lead_shape = x.shape[:-1]
    x2 = x.reshape(-1, H)
    N = x2.shape[0]

    x_itemsize = jnp.dtype(x.dtype).itemsize
    w_itemsize = jnp.dtype(w_packed.dtype).itemsize
    mxu_dtype = w_packed.dtype

    tile_m = _pick_tile_m(N, Hp)
    Np = _round_up(N, tile_m)
    num_row_tiles = Np // tile_m

    # pad rows / hidden dim only when actually needed (no-op for the small-H demo)
    if Np != N or Hp != H:
        x_p = jnp.pad(x2, ((0, Np - N), (0, Hp - H)))
    else:
        x_p = x2

    # ---- VMEM budgeting & path selection ------------------------------------
    vmem_cap = _vmem_budget_bytes()
    single_buf = _single_buffer_supported()
    weight_buffers = 1 if single_buf else 2

    resident_weight_bytes = weight_buffers * L * (Hp * Hp * w_itemsize + Hp * 4)
    tile_bytes = 4 * tile_m * Hp * x_itemsize          # x + out, each double-buffered
    work_bytes = 2 * tile_m * Hp * 4                   # f32 h + one temporary
    headroom = 2 << 20

    weight_budget = (max_resident_weight_bytes
                     if max_resident_weight_bytes is not None
                     else vmem_cap - tile_bytes - work_bytes - headroom)
    use_resident = resident_weight_bytes <= weight_budget

    if use_resident:
        vmem_needed = resident_weight_bytes + tile_bytes + work_bytes + headroom
        kernel = functools.partial(_residual_block_resident_kernel,
                                   n_layers=L, mxu_dtype=mxu_dtype)
        wkw = ({"pipeline_mode": pl.Buffered(buffer_count=1)} if single_buf else {})
        grid = (num_row_tiles,)
        in_specs = [
            pl.BlockSpec((tile_m, Hp), lambda i: (i, 0)),          # x row tile
            pl.BlockSpec((L, Hp, Hp), lambda i: (0, 0, 0), **wkw),  # resident weights
            pl.BlockSpec((L, 1, Hp), lambda i: (0, 0, 0), **wkw),   # resident biases
        ]
        out_specs = pl.BlockSpec((tile_m, Hp), lambda i: (i, 0))
        scratch_shapes = ()
        dim_sem = ("parallel",)
        weight_hbm_read_bytes = L * Hp * Hp * w_itemsize
    else:
        # Weights too big to keep resident: stream one layer's (Hp, Hp) block per
        # grid step, carrying the hidden state in a VMEM scratch across layers.
        vmem_needed = (2 * (Hp * Hp * w_itemsize + Hp * 4)   # streamed weights+bias
                       + tile_bytes + work_bytes
                       + tile_m * Hp * 4                     # h scratch
                       + headroom)
        kernel = functools.partial(_residual_block_streamed_kernel,
                                   mxu_dtype=mxu_dtype)
        grid = (num_row_tiles, L)
        in_specs = [
            pl.BlockSpec((tile_m, Hp), lambda i, l: (i, 0)),
            pl.BlockSpec((1, Hp, Hp), lambda i, l: (l, 0, 0)),
            pl.BlockSpec((1, 1, Hp), lambda i, l: (l, 0, 0)),
        ]
        out_specs = pl.BlockSpec((tile_m, Hp), lambda i, l: (i, 0))
        scratch_shapes = (pltpu.VMEM((tile_m, Hp), jnp.float32),)
        dim_sem = ("parallel", "arbitrary")
        weight_hbm_read_bytes = num_row_tiles * L * Hp * Hp * w_itemsize

    vmem_limit = int(min(vmem_cap, max(vmem_needed, 16 << 20)))

    cost = pl.CostEstimate(
        flops=2 * Np * L * Hp * Hp,
        transcendentals=0,
        bytes_accessed=int(2 * Np * Hp * x_itemsize
                           + weight_hbm_read_bytes
                           + b_packed.size * 4),
    )

    out = pl.pallas_call(
        kernel,
        out_shape=jax.ShapeDtypeStruct((Np, Hp), x.dtype),
        grid_spec=pltpu.PrefetchScalarGridSpec(
            num_scalar_prefetch=0,
            grid=grid,
            in_specs=in_specs,
            out_specs=out_specs,
            scratch_shapes=scratch_shapes,
        ),
        compiler_params=pltpu.CompilerParams(
            dimension_semantics=dim_sem,
            vmem_limit_bytes=vmem_limit,
        ),
        cost_estimate=cost,
    )(x_p, w_packed, b_packed)

    if Np != N or Hp != H:
        out = out[:N, :H]
    return out.reshape(*lead_shape, H)


# --------------------------------------------------------------------------- #
# parameter init (matches Dense.reset_parameters: xavier_normal_, gain=relu)
# --------------------------------------------------------------------------- #
def init_params(key, hidden_dim, n_layers):
    gain = jnp.sqrt(2.0)                                    # calculate_gain('relu')
    std = gain * jnp.sqrt(2.0 / (hidden_dim + hidden_dim))  # xavier_normal_ std
    keys = jax.random.split(key, n_layers)
    weights = jnp.stack(
        [std * jax.random.normal(k, (hidden_dim, hidden_dim), jnp.float32)
         for k in keys])                                    # (L, out, in) layout
    biases = jnp.zeros((n_layers, hidden_dim), jnp.float32)
    return weights, biases


# --------------------------------------------------------------------------- #
# references
# --------------------------------------------------------------------------- #
def _reference_f32(x, weights, biases):
    H = x.shape[-1]
    h = x.reshape(-1, H)
    x0 = h
    for l in range(weights.shape[0]):
        h = jnp.maximum(h @ weights[l].T + biases[l], 0.0)
    return (x0 + h).reshape(x.shape)


def _reference_bf16(x, weights, biases):
    """Mirrors the kernel's bf16-weight numerics: bf16 matmul operands, f32 acc,
    bias/ReLU/residual in f32."""
    H = x.shape[-1]
    h = x.reshape(-1, H).astype(jnp.float32)
    x0 = h
    for l in range(weights.shape[0]):
        h = jnp.dot(h.astype(jnp.bfloat16), weights[l].T.astype(jnp.bfloat16),
                    preferred_element_type=jnp.float32)
        h = jnp.maximum(h + biases[l], 0.0)
    return (x0 + h).reshape(x.shape).astype(x.dtype)


# --------------------------------------------------------------------------- #
# demo / self-test
# --------------------------------------------------------------------------- #
if __name__ == "__main__":
    hidden_dim = 32
    n_layers = 2
    batch, seq = 2, 8                      # x shape (2, 8, 32)

    key = jax.random.PRNGKey(0)
    kx, kp = jax.random.split(key)
    x = jax.random.normal(kx, (batch, seq, hidden_dim), jnp.float32)
    weights, biases = init_params(kp, hidden_dim, n_layers)

    ref_f32 = _reference_f32(x, weights, biases)
    ref_bf16 = _reference_bf16(x, weights, biases)

    # 1) default f32-weight path (matches the PyTorch module's precision intent);
    #    loose-ish tolerance accounts for MXU default-precision matmul differences.
    w32, b32 = prepack_params(weights, biases, mxu_dtype=jnp.float32)
    out_f32 = jax.block_until_ready(residual_block(x, w32, b32))
    assert out_f32.shape == x.shape and out_f32.dtype == x.dtype
    assert jnp.allclose(out_f32, ref_f32, atol=2e-2, rtol=2e-2), \
        float(jnp.max(jnp.abs(out_f32 - ref_f32)))

    # 2) explicit bf16-weight fast path (opt-in), checked tightly against a
    #    reference with the same bf16-operand / f32-acc math.
    wbf, bbf = prepack_params(weights, biases, mxu_dtype=jnp.bfloat16)
    out_bf = jax.block_until_ready(residual_block(x, wbf, bbf))
    assert jnp.allclose(out_bf, ref_bf16, atol=1e-3, rtol=1e-3), \
        float(jnp.max(jnp.abs(out_bf - ref_bf16)))
    assert jnp.allclose(out_bf, ref_f32, atol=5e-2, rtol=5e-2)

    # 3) streamed-weights path (auto-selected for large L*Hp^2; forced here).
    out_st = jax.block_until_ready(
        residual_block(x, wbf, bbf, max_resident_weight_bytes=0))
    assert jnp.allclose(out_st, ref_bf16, atol=1e-3, rtol=1e-3), \
        float(jnp.max(jnp.abs(out_st - ref_bf16)))

    print("KERNEL_OK")
</pallas_src>

<mosaic_0001>
module attributes {stable_mosaic.version = 11 : i64} {
  func.func @_copy(%arg0: i32, %arg1: memref<8x128xf32, #tpu.memory_space<vmem>>, %arg2: memref<8x128xf32, #tpu.memory_space<vmem>>) attributes {dimension_semantics = [#tpu.dimension_semantics<arbitrary>], iteration_bounds = array<i64: 1>, scalar_prefetch = 0 : i64, scratch_operands = 0 : i64, tpu.core_type = #tpu.core_type<tc>, window_params = [{pipeline_mode = #tpu.pipeline_mode<synchronous>, transform_indices = @transform_0, window_bounds = array<i64: 8, 128>}, {pipeline_mode = #tpu.pipeline_mode<synchronous>, transform_indices = @transform_1, window_bounds = array<i64: 8, 128>}]} {
    %c0 = arith.constant 0 : index
    %c0_0 = arith.constant 0 : index
    %0 = vector.load %arg1[%c0, %c0_0] : memref<8x128xf32, #tpu.memory_space<vmem>>, vector<8x128xf32>
    %c0_1 = arith.constant 0 : index
    %c0_2 = arith.constant 0 : index
    %1 = vector.load %arg2[%c0_1, %c0_2] : memref<8x128xf32, #tpu.memory_space<vmem>>, vector<8x128xf32>
    tpu.vector_store %arg2[%c0_1, %c0_2], %0 {strides = array<i32>} : memref<8x128xf32, #tpu.memory_space<vmem>>, vector<8x128xf32>,
    return
  }
  func.func @transform_0(%arg0: i32) -> (i32, i32) {
    %c0_i32 = arith.constant 0 : i32
    %c0_i32_0 = arith.constant 0 : i32
    %c0_i32_1 = arith.constant 0 : i32
    return %c0_i32, %c0_i32_0 : i32, i32
  }
  func.func @transform_1(%arg0: i32) -> (i32, i32) {
    %c0_i32 = arith.constant 0 : i32
    %c0_i32_0 = arith.constant 0 : i32
    %c0_i32_1 = arith.constant 0 : i32
    return %c0_i32, %c0_i32_0 : i32, i32
  }
}

module attributes {stable_mosaic.version = 11 : i64} {
  func.func @_residual_block_resident_kernel(%arg0: i32, %arg1: memref<8x32xf32, #tpu.memory_space<vmem>>, %arg2: memref<2x32x32xf32, #tpu.memory_space<vmem>>, %arg3: memref<2x1x32xf32, #tpu.memory_space<vmem>>, %arg4: memref<8x32xf32, #tpu.memory_space<vmem>>) attributes {dimension_semantics = [#tpu.dimension_semantics<parallel>], iteration_bounds = array<i64: 2>, scalar_prefetch = 0 : i64, scratch_operands = 0 : i64, tpu.core_type = #tpu.core_type<tc>, window_params = [{transform_indices = @transform_0, window_bounds = array<i64: 8, 32>}, {pipeline_mode = #tpu.pipeline_mode<synchronous>, transform_indices = @transform_1, window_bounds = array<i64: 2, 32, 32>}, {pipeline_mode = #tpu.pipeline_mode<synchronous>, transform_indices = @transform_2, window_bounds = array<i64: 2, 1, 32>}, {transform_indices = @transform_3, window_bounds = array<i64: 8, 32>}]} {
    %c0 = arith.constant 0 : index
    %c0_0 = arith.constant 0 : index
    %0 = vector.load %arg1[%c0, %c0_0] : memref<8x32xf32, #tpu.memory_space<vmem>>, vector<8x32xf32>
    %c0_1 = arith.constant 0 : index
    %c0_2 = arith.constant 0 : index
    %c0_3 = arith.constant 0 : index
    %1 = vector.load %arg2[%c0_1, %c0_2, %c0_3] : memref<2x32x32xf32, #tpu.memory_space<vmem>>, vector<1x32x32xf32>
    %2 = vector.shape_cast %1 : vector<1x32x32xf32> to vector<32x32xf32>
    %cst = arith.constant dense<0.000000e+00> : vector<8x32xf32>
    %3 = tpu.matmul %0, %2, %cst {dimension_numbers = #tpu.dot_dimension_numbers<[1], [0], [0], [1], [0, 0, 1, 1], [], []>} : vector<8x32xf32>, vector<32x32xf32>, vector<8x32xf32> -> vector<8x32xf32>
    %c0_4 = arith.constant 0 : index
    %c0_5 = arith.constant 0 : index
    %c0_6 = arith.constant 0 : index
    %4 = vector.load %arg3[%c0_4, %c0_5, %c0_6] : memref<2x1x32xf32, #tpu.memory_space<vmem>>, vector<1x1x32xf32>
    %5 = vector.shape_cast %4 : vector<1x1x32xf32> to vector<1x32xf32>
    %6 = vector.broadcast %5 : vector<1x32xf32> to vector<8x32xf32>
    %7 = arith.addf %3, %6 : vector<8x32xf32>
    %cst_7 = arith.constant 0.000000e+00 : f32
    %8 = vector.broadcast %cst_7 : f32 to vector<8x32xf32>
    %9 = arith.maximumf %7, %8 : vector<8x32xf32>
    %c1 = arith.constant 1 : index
    %c0_8 = arith.constant 0 : index
    %c0_9 = arith.constant 0 : index
    %10 = vector.load %arg2[%c1, %c0_8, %c0_9] : memref<2x32x32xf32, #tpu.memory_space<vmem>>, vector<1x32x32xf32>
    %11 = vector.shape_cast %10 : vector<1x32x32xf32> to vector<32x32xf32>
    %cst_10 = arith.constant dense<0.000000e+00> : vector<8x32xf32>
    %12 = tpu.matmul %9, %11, %cst_10 {dimension_numbers = #tpu.dot_dimension_numbers<[1], [0], [0], [1], [0, 0, 1, 1], [], []>} : vector<8x32xf32>, vector<32x32xf32>, vector<8x32xf32> -> vector<8x32xf32>
    %c1_11 = arith.constant 1 : index
    %c0_12 = arith.constant 0 : index
    %c0_13 = arith.constant 0 : index
    %13 = vector.load %arg3[%c1_11, %c0_12, %c0_13] : memref<2x1x32xf32, #tpu.memory_space<vmem>>, vector<1x1x32xf32>
    %14 = vector.shape_cast %13 : vector<1x1x32xf32> to vector<1x32xf32>
    %15 = vector.broadcast %14 : vector<1x32xf32> to vector<8x32xf32>
    %16 = arith.addf %12, %15 : vector<8x32xf32>
    %cst_14 = arith.constant 0.000000e+00 : f32
    %17 = vector.broadcast %cst_14 : f32 to vector<8x32xf32>
    %18 = arith.maximumf %16, %17 : vector<8x32xf32>
    %c0_15 = arith.constant 0 : index
    %c0_16 = arith.constant 0 : index
    %19 = vector.load %arg1[%c0_15, %c0_16] : memref<8x32xf32, #tpu.memory_space<vmem>>, vector<8x32xf32>
    %20 = arith.addf %19, %18 : vector<8x32xf32>
    %c0_17 = arith.constant 0 : index
    %c0_18 = arith.constant 0 : index
    %21 = vector.load %arg4[%c0_17, %c0_18] : memref<8x32xf32, #tpu.memory_space<vmem>>, vector<8x32xf32>
    tpu.vector_store %arg4[%c0_17, %c0_18], %20 {strides = array<i32>} : memref<8x32xf32, #tpu.memory_space<vmem>>, vector<8x32xf32>,
    return
  }
  func.func @transform_0(%arg0: i32) -> (i32, i32) {
    %c0_i32 = arith.constant 0 : i32
    %c0_i32_0 = arith.constant 0 : i32
    return %arg0, %c0_i32 : i32, i32
  }
  func.func @transform_1(%arg0: i32) -> (i32, i32, i32) {
    %c0_i32 = arith.constant 0 : i32
    %c0_i32_0 = arith.constant 0 : i32
    %c0_i32_1 = arith.constant 0 : i32
    %c0_i32_2 = arith.constant 0 : i32
    return %c0_i32, %c0_i32_0, %c0_i32_1 : i32, i32, i32
  }
  func.func @transform_2(%arg0: i32) -> (i32, i32, i32) {
    %c0_i32 = arith.constant 0 : i32
    %c0_i32_0 = arith.constant 0 : i32
    %c0_i32_1 = arith.constant 0 : i32
    %c0_i32_2 = arith.constant 0 : i32
    return %c0_i32, %c0_i32_0, %c0_i32_1 : i32, i32, i32
  }
  func.func @transform_3(%arg0: i32) -> (i32, i32) {
    %c0_i32 = arith.constant 0 : i32
    %c0_i32_0 = arith.constant 0 : i32
    return %arg0, %c0_i32 : i32, i32
  }
}

</mosaic_0001>

<llo_original>
// kernel: tpu_custom_call.1
$region0: #{tpu_custom_call.1}
  #allocation0 [shape = 'u32[]', space=smem, size = 0x4, offset = 0x4, fixed_abs, tag = 'smem constant byte address 0x4 - core index']
  #allocation1 [shape = 'u32[144,128]{1,0:T(1,128)}', space=vmem, size = 0x12000, scoped, tag = 'internal scratch']
  %s0 = inlined_call_operand.hbm [shape: f32[8,128], index: 0, kind: input, shape index: {}]
  %s1 = inlined_call_operand.hbm [shape: f32[8,128], index: 1, kind: output, shape index: {}]
  %s2 = sld [smem:[#allocation0]]
  $region18: #{tpu_custom_call.1} parent=0
    _
  %s4 = ssub.s32 1, %s2
  %s5 = scalar_select 0, %s4, %s2
  $region1: #{tpu_custom_call.1} parent=0
    #allocation2 [shape = 'u8[4096]{0}', space=vmem, size = 0x1000, scoped, tag = 'input window, operand 0, single buffered']
    #allocation3 [shape = 's32[1]{0}', space=sflag, size = 0x4, scoped, tag = 'scoped memory for tpu_custom_call.1']
    #allocation4 [shape = 's32[1]{0}', space=sflag, size = 0x4, scoped, tag = 'scoped memory for tpu_custom_call.1']
    #allocation5 [shape = 'u8[4096]{0}', space=vmem, size = 0x1000, scoped, tag = 'output window, operand 0, single buffered']
    %6 = vsyncpa [#allocation3], 0
    %7 = vsyncpa [#allocation4], 0
    // Predicated region
    $region2: #{tpu_custom_call.1} parent=1 // pred_check
      _
    $region3: #{tpu_custom_call.1} parent=1 // pred_check_branch
      %9 = sbr.rel (0) target = $region5
    $region4: #{tpu_custom_call.1} parent=1 // pred_region
      %s11 = ssub.s32 128, 128
      %12 = vsyncadd [#allocation3], %s11
      %s14 = sshll.u32 [#allocation2], 4
      %s15 = int_to_ptr.vmem [resolvable:$true] %s14
      %17 = dma.hbm_to_vmem [thread:$0]  %s0, 128, %s15, [#allocation3]
    $region5: #{tpu_custom_call.1} parent=1 // pred_fallthru
      _
    // Predicated region
    $region6: #{tpu_custom_call.1} parent=1 // pred_check
      _
    $region7: #{tpu_custom_call.1} parent=1 // pred_check_branch
      %19 = sbr.rel (0) target = $region9
    $region8: #{tpu_custom_call.1} parent=1 // pred_region
      %20 = dma.done [#allocation3], 128
    $region9: #{tpu_custom_call.1} parent=1 // pred_fallthru
      _
    %v21 = vld [vmem:[#allocation2] sm:$0xff]
    %22 = vst [vmem:[#allocation5] sm:$0xff] %v21
    // Predicated region
    $region10: #{tpu_custom_call.1} parent=1 // pred_check
      _
    $region11: #{tpu_custom_call.1} parent=1 // pred_check_branch
      %24 = sbr.rel (0) target = $region13
    $region12: #{tpu_custom_call.1} parent=1 // pred_region
      %s26 = ssub.s32 128, 128
      %27 = vsyncadd [#allocation4], %s26
      %s29 = sshll.u32 [#allocation5], 4
      %s30 = int_to_ptr.vmem [resolvable:$true] %s29
      %32 = dma.vmem_to_hbm [thread:$0]  %s30, 128, %s1, [#allocation4]
    $region13: #{tpu_custom_call.1} parent=1 // pred_fallthru
      _
    // Predicated region
    $region14: #{tpu_custom_call.1} parent=1 // pred_check
      _
    $region15: #{tpu_custom_call.1} parent=1 // pred_check_branch
      %34 = sbr.rel (0) target = $region17
    $region16: #{tpu_custom_call.1} parent=1 // pred_region
      %35 = dma.done [#allocation4], 128
    $region17: #{tpu_custom_call.1} parent=1 // pred_fallthru
      _
    %36 = vsyncpa [#allocation3], 1
    %37 = vsyncpa [#allocation4], 1

// kernel: tpu_custom_call.1
$region0: #{tpu_custom_call.1}
  #allocation0 [shape = 'u32[]', space=smem, size = 0x4, offset = 0x4, fixed_abs, tag = 'smem constant byte address 0x4 - core index']
  #allocation1 [shape = 'u32[144,128]{1,0:T(1,128)}', space=vmem, size = 0x12000, scoped, tag = 'internal scratch']
  %s0 = inlined_call_operand.hbm [shape: f32[16,32], index: 0, kind: input, shape index: {}]
  %s1 = inlined_call_operand.hbm [shape: f32[2,32,32], index: 1, kind: input, shape index: {}]
  %s2 = inlined_call_operand.vmem [shape: f32[2,1,32], index: 2, kind: input, shape index: {}]
  %s3 = inlined_call_operand.hbm [shape: f32[16,32], index: 3, kind: output, shape index: {}]
  %s4 = sld [smem:[#allocation0]]
  $region53: #{tpu_custom_call.1} parent=0
    _
  %s6 = ssub.s32 1, %s4
  %s7 = scalar_select 0, %s6, %s4
  $region1: #{tpu_custom_call.1} parent=0
    #allocation2 [shape = 'u8[8192]{0}', space=vmem, size = 0x2000, scoped, tag = 'input window, operand 0']
    #allocation3 [shape = 's32[2]{0}', space=sflag, size = 0x8, scoped, tag = 'scoped memory for tpu_custom_call.1']
    #allocation4 [shape = 's32[2]{0}', space=sflag, size = 0x8, scoped, tag = 'scoped memory for tpu_custom_call.1']
    #allocation5 [shape = 'u8[32768]{0}', space=vmem, size = 0x8000, scoped, tag = 'input window, operand 1, single buffered']
    #allocation6 [shape = 's32[1]{0}', space=sflag, size = 0x4, scoped, tag = 'scoped memory for tpu_custom_call.1']
    #allocation7 [shape = 'u8[8192]{0}', space=vmem, size = 0x2000, scoped, tag = 'output window, operand 0']
    %8 = vsyncpa [#allocation3], 0
    %s9 = scalar_lea.sflag [#allocation3], 1
    %10 = vsyncpa %s9, 0
    %11 = vsyncpa [#allocation6], 0
    %12 = vsyncpa [#allocation4], 0
    %s13 = scalar_lea.sflag [#allocation4], 1
    %14 = vsyncpa %s13, 0
    loop: start=0, step=1, limit=4
    $region2: #{tpu_custom_call.1} parent=1 // loop_pre_header
      _
    $region3: #{tpu_custom_call.1} parent=1 // loop_header
      %s16 = sphi 0, %s20
      %p17 = scmp.ge.s32.totalorder %s16, 4
      %s26 = sphi 0, %s28
      %s29 = sphi 0, %s26
      %s30 = sphi 0, %s29
      %s46 = sphi 0, %s30
      %s50 = sphi 0, %s50
      %s52 = sphi 0, %s50
      %s53 = sphi 0, %s52
      %s67 = sphi 0, %s53
      %s71 = sphi 0, %s71
      %s73 = sphi 0, %s71
      %s74 = sphi 0, %s73
      %s88 = sphi 0, %s74
      %s94 = sphi 0, %s96
      %s97 = sphi 0, %s94
      %s98 = sphi 0, %s97
      %s114 = sphi 0, %s98
    $region4: #{tpu_custom_call.1} parent=1 // loop_header_branch
      %19 = sbr.rel (%p17) target = $region8
    $region5: #{tpu_custom_call.1} parent=1 // loop_body
      %s21 = ssub.s32 %s16, 1
      %s22 = ssub.s32 %s16, 2
      %s23 = sadd.s32 %s16, 1
      %s24 = ssub.s32 %s16, %s23
      %p25 = scmp.eq.s32.totalorder %s24, 0
      %s27 = sadd.s32 %s26, 1
      %s28 = scalar_select %p25, %s26, %s27
      %p31 = pneg %p25
      %p32 = scmp.eq.s32.totalorder %s16, 1
      %p33 = por %p31, %p32
      %p34 = scmp.ne.s32.totalorder %s26, %s29
      %p35 = scmp.eq.s32.totalorder %s16, 0
      %p36 = por %p34, %p35
      %p37 = scmp.ne.s32.totalorder %s26, %s29
      %p38 = scmp.eq.s32.totalorder %s21, 1
      %p39 = por %p37, %p38
      %p40 = scmp.ne.s32.totalorder %s29, %s30
      %p41 = scmp.eq.s32.totalorder %s21, 0
      %p42 = por %p40, %p41
      %p43 = scmp.ne.s32.totalorder %s29, %s30
      %p44 = scmp.eq.s32.totalorder %s22, 1
      %p45 = por %p43, %p44
      %p47 = scmp.ne.s32.totalorder %s30, %s46
      %p48 = scmp.eq.s32.totalorder %s22, 0
      %p49 = por %p47, %p48
      %s51 = sadd.s32 %s50, 1
      %p54 = scmp.eq.s32.totalorder %s16, 1
      %p55 = scmp.ne.s32.totalorder %s50, %s52
      %p56 = scmp.eq.s32.totalorder %s16, 0
      %p57 = por %p55, %p56
      %p58 = scmp.ne.s32.totalorder %s50, %s52
      %p59 = scmp.eq.s32.totalorder %s21, 1
      %p60 = por %p58, %p59
      %p61 = scmp.ne.s32.totalorder %s52, %s53
      %p62 = scmp.eq.s32.totalorder %s21, 0
      %p63 = por %p61, %p62
      %p64 = scmp.ne.s32.totalorder %s52, %s53
      %p65 = scmp.eq.s32.totalorder %s22, 1
      %p66 = por %p64, %p65
      %p68 = scmp.ne.s32.totalorder %s53, %s67
      %p69 = scmp.eq.s32.totalorder %s22, 0
      %p70 = por %p68, %p69
      %s72 = sadd.s32 %s71, 1
      %p75 = scmp.eq.s32.totalorder %s16, 1
      %p76 = scmp.ne.s32.totalorder %s71, %s73
      %p77 = scmp.eq.s32.totalorder %s16, 0
      %p78 = por %p76, %p77
      %p79 = scmp.ne.s32.totalorder %s71, %s73
      %p80 = scmp.eq.s32.totalorder %s21, 1
      %p81 = por %p79, %p80
      %p82 = scmp.ne.s32.totalorder %s73, %s74
      %p83 = scmp.eq.s32.totalorder %s21, 0
      %p84 = por %p82, %p83
      %p85 = scmp.ne.s32.totalorder %s73, %s74
      %p86 = scmp.eq.s32.totalorder %s22, 1
      %p87 = por %p85, %p86
      %p89 = scmp.ne.s32.totalorder %s74, %s88
      %p90 = scmp.eq.s32.totalorder %s22, 0
      %p91 = por %p89, %p90
      %s92 = ssub.s32 %s16, %s23
      %p93 = scmp.eq.s32.totalorder %s92, 0
      %s95 = sadd.s32 %s94, 1
      %s96 = scalar_select %p93, %s94, %s95
      %p99 = pneg %p93
      %p100 = scmp.eq.s32.totalorder %s16, 1
      %p101 = por %p99, %p100
      %p102 = scmp.ne.s32.totalorder %s94, %s97
      %p103 = scmp.eq.s32.totalorder %s16, 0
      %p104 = por %p102, %p103
      %p105 = scmp.ne.s32.totalorder %s94, %s97
      %p106 = scmp.eq.s32.totalorder %s21, 1
      %p107 = por %p105, %p106
      %p108 = scmp.ne.s32.totalorder %s97, %s98
      %p109 = scmp.eq.s32.totalorder %s21, 0
      %p110 = por %p108, %p109
      %p111 = scmp.ne.s32.totalorder %s97, %s98
      %p112 = scmp.eq.s32.totalorder %s22, 1
      %p113 = por %p111, %p112
      %p115 = scmp.ne.s32.totalorder %s98, %s114
      %p116 = scmp.eq.s32.totalorder %s22, 0
      %p117 = por %p115, %p116
      %p118 = scmp.le.s32.totalorder 1, %s16
      %p119 = scmp.lt.s32.totalorder %s16, 3
      %p120 = pnand %p118, %p119
      %p121 = pneg %p120
      // Predicated region
      $region9: #{tpu_custom_call.1} parent=5 // pred_check
        _
      $region10: #{tpu_custom_call.1} parent=5 // pred_check_branch
        %123 = sbr.rel (%p120) target = $region12
      $region11: #{tpu_custom_call.1} parent=5 // pred_region
        %s124 = ssub.s32 %s16, 1
        // Predicated region
        $region13: #{tpu_custom_call.1} parent=11 // pred_check
          %p125 = pneg %p63
        $region14: #{tpu_custom_call.1} parent=11 // pred_check_branch
          %127 = sbr.rel (%p125) target = $region16
        $region15: #{tpu_custom_call.1} parent=11 // pred_region
          %s129 = ssub.s32 1024, 1024
          %130 = vsyncadd [#allocation6], %s129
          %s131 = sshll.u32 [#allocation5], 4
          %s132 = int_to_ptr.vmem [resolvable:$true] %s131
          %137 = dma.hbm_to_vmem [thread:$0]  %s1, 1024, %s132, [#allocation6], 128, 128, 8
        $region16: #{tpu_custom_call.1} parent=11 // pred_fallthru
          _
        // Predicated region
        $region17: #{tpu_custom_call.1} parent=11 // pred_check
          %p138 = pneg %p84
        $region18: #{tpu_custom_call.1} parent=11 // pred_check_branch
          %140 = sbr.rel (%p138) target = $region20
        $region19: #{tpu_custom_call.1} parent=11 // pred_region
          _
        $region20: #{tpu_custom_call.1} parent=11 // pred_fallthru
          _
      $region12: #{tpu_custom_call.1} parent=5 // pred_fallthru
        _
      %p141 = scmp.lt.s32.totalorder %s16, 2
      // Predicated region
      $region21: #{tpu_custom_call.1} parent=5 // pred_check
        %p142 = pneg %p141
      $region22: #{tpu_custom_call.1} parent=5 // pred_check_branch
        %144 = sbr.rel (%p142) target = $region24
      $region23: #{tpu_custom_call.1} parent=5 // pred_region
        // Predicated region
        $region25: #{tpu_custom_call.1} parent=23 // pred_check
          %p145 = pneg %p36
        $region26: #{tpu_custom_call.1} parent=23 // pred_check_branch
          %147 = sbr.rel (%p145) target = $region28
        $region27: #{tpu_custom_call.1} parent=23 // pred_region
          %s148 = sand.u32 %s26, 1
          %s149 = scalar_lea.sflag [#allocation3], %s148
          %s150 = sand.u32 %s26, 1
          %s151 = smul.addr %s150, 8
          %s152 = scalar_lea.vmem [#allocation2], %s151
          %s154 = ssub.s32 128, 128
          %155 = vsyncadd %s149, %s154
          %s156 = smul.addr %s16, 128
          %s157 = scalar_lea.hbm %s0, %s156
          %s159 = sshll.u32 %s152, 4
          %s160 = int_to_ptr.vmem [resolvable:$true] %s159
          %162 = dma.hbm_to_vmem [thread:$0]  %s157, 128, %s160, %s149
        $region28: #{tpu_custom_call.1} parent=23 // pred_fallthru
          _
      $region24: #{tpu_custom_call.1} parent=5 // pred_fallthru
        _
      %p163 = scmp.le.s32.totalorder 1, %s16
      %p164 = scmp.lt.s32.totalorder %s16, 3
      %p165 = pnand %p163, %p164
      %p166 = pneg %p165
      // Predicated region
      $region29: #{tpu_custom_call.1} parent=5 // pred_check
        _
      $region30: #{tpu_custom_call.1} parent=5 // pred_check_branch
        %168 = sbr.rel (%p165) target = $region32
      $region31: #{tpu_custom_call.1} parent=5 // pred_region
        %s169 = ssub.s32 %s16, 1
        %s170 = sand.u32 %s29, 1
        %s171 = scalar_lea.sflag [#allocation3], %s170
        %s172 = sand.u32 %s29, 1
        %s173 = smul.addr %s172, 8
        %s174 = scalar_lea.vmem [#allocation2], %s173
        // Predicated region
        $region33: #{tpu_custom_call.1} parent=31 // pred_check
          %p175 = pneg %p42
        $region34: #{tpu_custom_call.1} parent=31 // pred_check_branch
          %177 = sbr.rel (%p175) target = $region36
        $region35: #{tpu_custom_call.1} parent=31 // pred_region
          %178 = dma.done %s171, 128
        $region36: #{tpu_custom_call.1} parent=31 // pred_fallthru
          _
        // Predicated region
        $region37: #{tpu_custom_call.1} parent=31 // pred_check
          %p179 = pneg %p63
        $region38: #{tpu_custom_call.1} parent=31 // pred_check_branch
          %181 = sbr.rel (%p179) target = $region40
        $region39: #{tpu_custom_call.1} parent=31 // pred_region
          %182 = dma.done [#allocation6], 1024
        $region40: #{tpu_custom_call.1} parent=31 // pred_fallthru
          _
        %s183 = sand.u32 %s29, 1
        %s184 = scalar_lea.sflag [#allocation3], %s183
        %s185 = sand.u32 %s29, 1
        %s186 = smul.addr %s185, 8
        %s187 = scalar_lea.vmem [#allocation2], %s186
        %p188 = pneg %p42
        %p189 = pneg %p39
        %p190 = pneg %p63
        %p191 = pneg %p60
        %p192 = pneg %p84
        %p193 = pneg %p81
        %p194 = pneg %p110
        %p195 = pneg %p107
        %s196 = sand.u32 %s97, 1
        %s197 = scalar_lea.sflag [#allocation4], %s196
        %s198 = sand.u32 %s97, 1
        %s199 = smul.addr %s198, 8
        %s200 = scalar_lea.vmem [#allocation7], %s199
        %v201 = vld [vmem:[%s174] sm:$0xff]
        %v202 = vld [vmem:[#allocation5] sm:$0xff]
        %v203 = vld [vmem:[#allocation5 + $0x8] sm:$0xff]
        %v204 = vld [vmem:[#allocation5 + $0x10] sm:$0xff]
        %v205 = vld [vmem:[#allocation5 + $0x18] sm:$0xff]
        %v206 = vld [vmem:[%s2] sm:$0x1]
        %v208 = vlaneseq
        %v209 = vshrl.u32 %v208, 7
        %v210 = vsub.s32 0, %v209
        %v211 = vrot.slane %v206, %v210
        %vm213 = vcmask 261120
        %v215 = vsel %vm213, %v201, 0
        %217 = vmatprep.subr.mxu0 0.0
        %218 = vmatpush1.msra.mxu0 %v202
        %219 = vmatprep.subr.mxu0 0.0
        %220 = vmatpush1.msra.mxu0 %v203
        %221 = vmatprep.subr.mxu0 0.0
        %222 = vmatpush1.msra.mxu0 %v204
        %223 = vmatprep.subr.mxu0 0.0
        %224 = vmatpush1.msra.mxu0 %v205
        %225 = vmatprep.subr.mxu0 0.0
        %226 = vmatpush1.msra.mxu0 0.0
        %227 = vmatprep.subr.mxu0 0.0
        %228 = vmatpush1.msra.mxu0 0.0
        %229 = vmatprep.subr.mxu0 0.0
        %230 = vmatpush1.msra.mxu0 0.0
        %231 = vmatprep.subr.mxu0 0.0
        %232 = vmatpush1.msra.mxu0 0.0
        %233 = vmatprep.subr.mxu0 0.0
        %234 = vmatpush1.msra.mxu0 0.0
        %235 = vmatprep.subr.mxu0 0.0
        %236 = vmatpush1.msra.mxu0 0.0
        %237 = vmatprep.subr.mxu0 0.0
        %238 = vmatpush1.msra.mxu0 0.0
        %239 = vmatprep.subr.mxu0 0.0
        %240 = vmatpush1.msra.mxu0 0.0
        %241 = vmatprep.subr.mxu0 0.0
        %242 = vmatpush1.msra.mxu0 0.0
        %243 = vmatprep.subr.mxu0 0.0
        %244 = vmatpush1.msra.mxu0 0.0
        %245 = vmatprep.subr.mxu0 0.0
        %246 = vmatpush1.msra.mxu0 0.0
        %247 = vmatprep.subr.mxu0 0.0
        %248 = vmatpush1.msra.mxu0 0.0
        %249 = vmatprep.subr.mxu0 0.0
        %250 = vmatpush1.msra.mxu0 0.0
        %251 = vmatprep.subr.mxu0 0.0
        %252 = vmatpush1.msra.mxu0 0.0
        %253 = vmatprep.subr.mxu0 0.0
        %254 = vmatpush1.msra.mxu0 0.0
        %255 = vmatprep.subr.mxu0 0.0
        %256 = vmatpush1.msra.mxu0 0.0
        %257 = vmatprep.subr.mxu0 0.0
        %258 = vmatpush1.msra.mxu0 0.0
        %259 = vmatprep.subr.mxu0 0.0
        %260 = vmatpush1.msra.mxu0 0.0
        %261 = vmatprep.subr.mxu0 0.0
        %262 = vmatpush1.msra.mxu0 0.0
        %263 = vmatprep.subr.mxu0 0.0
        %264 = vmatpush1.msra.mxu0 0.0
        %265 = vmatprep.subr.mxu0 0.0
        %266 = vmatpush1.msra.mxu0 0.0
        %267 = vmatprep.subr.mxu0 0.0
        %268 = vmatpush1.msra.mxu0 0.0
        %269 = vmatprep.subr.mxu0 0.0
        %270 = vmatpush1.msra.mxu0 0.0
        %271 = vmatprep.subr.mxu0 0.0
        %272 = vmatpush1.msra.mxu0 0.0
        %273 = vmatprep.subr.mxu0 0.0
        %274 = vmatpush1.msra.mxu0 0.0
        %275 = vmatprep.subr.mxu0 0.0
        %276 = vmatpush1.msra.mxu0 0.0
        %277 = vmatprep.subr.mxu0 0.0
        %278 = vmatpush1.msra.mxu0 0.0
        %279 = vmatprep.subr.mxu0 0.0
        %280 = vmatpush1.msra.mxu0 0.0
        %281 = vmatprep.mubr.f32.mxu0 0.0
        %282 = vmatmul.mubr.f32.gmra.mrb[0].mxu0 %v215
        %v283 = vpop.f32.mrb[0].mxu0
        %v284 = vadd.f32 %v211, %v283
        %v285 = vpop.f32.mrb[0].mxu0
        %286 = vdwg.mxu0
        %v287 = vmax.f32 %v284, 0.0
        %s288 = scalar_lea.vmem [#allocation5], 32
        %v289 = vld [vmem:[%s288] sm:$0xff]
        %v290 = vld [vmem:[%s288 + $0x8] sm:$0xff]
        %v291 = vld [vmem:[%s288 + $0x10] sm:$0xff]
        %v292 = vld [vmem:[%s288 + $0x18] sm:$0xff]
        %s293 = scalar_lea.vmem %s2, 1
        %v294 = vld [vmem:[%s293] sm:$0x1]
        %v296 = vlaneseq
        %v297 = vshrl.u32 %v296, 7
        %v298 = vsub.s32 0, %v297
        %v299 = vrot.slane %v294, %v298
        %v302 = vsel %vm213, %v287, 0
        %304 = vmatprep.subr.mxu0 0.0
        %305 = vmatpush1.msra.mxu0 %v289
        %306 = vmatprep.subr.mxu0 0.0
        %307 = vmatpush1.msra.mxu0 %v290
        %308 = vmatprep.subr.mxu0 0.0
        %309 = vmatpush1.msra.mxu0 %v291
        %310 = vmatprep.subr.mxu0 0.0
        %311 = vmatpush1.msra.mxu0 %v292
        %312 = vmatprep.subr.mxu0 0.0
        %313 = vmatpush1.msra.mxu0 0.0
        %314 = vmatprep.subr.mxu0 0.0
        %315 = vmatpush1.msra.mxu0 0.0
        %316 = vmatprep.subr.mxu0 0.0
        %317 = vmatpush1.msra.mxu0 0.0
        %318 = vmatprep.subr.mxu0 0.0
        %319 = vmatpush1.msra.mxu0 0.0
        %320 = vmatprep.subr.mxu0 0.0
        %321 = vmatpush1.msra.mxu0 0.0
        %322 = vmatprep.subr.mxu0 0.0
        %323 = vmatpush1.msra.mxu0 0.0
        %324 = vmatprep.subr.mxu0 0.0
        %325 = vmatpush1.msra.mxu0 0.0
        %326 = vmatprep.subr.mxu0 0.0
        %327 = vmatpush1.msra.mxu0 0.0
        %328 = vmatprep.subr.mxu0 0.0
        %329 = vmatpush1.msra.mxu0 0.0
        %330 = vmatprep.subr.mxu0 0.0
        %331 = vmatpush1.msra.mxu0 0.0
        %332 = vmatprep.subr.mxu0 0.0
        %333 = vmatpush1.msra.mxu0 0.0
        %334 = vmatprep.subr.mxu0 0.0
        %335 = vmatpush1.msra.mxu0 0.0
        %336 = vmatprep.subr.mxu0 0.0
        %337 = vmatpush1.msra.mxu0 0.0
        %338 = vmatprep.subr.mxu0 0.0
        %339 = vmatpush1.msra.mxu0 0.0
        %340 = vmatprep.subr.mxu0 0.0
        %341 = vmatpush1.msra.mxu0 0.0
        %342 = vmatprep.subr.mxu0 0.0
        %343 = vmatpush1.msra.mxu0 0.0
        %344 = vmatprep.subr.mxu0 0.0
        %345 = vmatpush1.msra.mxu0 0.0
        %346 = vmatprep.subr.mxu0 0.0
        %347 = vmatpush1.msra.mxu0 0.0
        %348 = vmatprep.subr.mxu0 0.0
        %349 = vmatpush1.msra.mxu0 0.0
        %350 = vmatprep.subr.mxu0 0.0
        %351 = vmatpush1.msra.mxu0 0.0
        %352 = vmatprep.subr.mxu0 0.0
        %353 = vmatpush1.msra.mxu0 0.0
        %354 = vmatprep.subr.mxu0 0.0
        %355 = vmatpush1.msra.mxu0 0.0
        %356 = vmatprep.subr.mxu0 0.0
        %357 = vmatpush1.msra.mxu0 0.0
        %358 = vmatprep.subr.mxu0 0.0
        %359 = vmatpush1.msra.mxu0 0.0
        %360 = vmatprep.subr.mxu0 0.0
        %361 = vmatpush1.msra.mxu0 0.0
        %362 = vmatprep.subr.mxu0 0.0
        %363 = vmatpush1.msra.mxu0 0.0
        %364 = vmatprep.subr.mxu0 0.0
        %365 = vmatpush1.msra.mxu0 0.0
        %366 = vmatprep.subr.mxu0 0.0
        %367 = vmatpush1.msra.mxu0 0.0
        %368 = vmatprep.mubr.f32.mxu0 0.0
        %369 = vmatmul.mubr.f32.gmra.mrb[0].mxu0 %v302
        %v370 = vpop.f32.mrb[0].mxu0
        %v371 = vadd.f32 %v299, %v370
        %v372 = vpop.f32.mrb[0].mxu0
        %373 = vdwg.mxu0
        %v374 = vmax.f32 %v371, 0.0
        %v375 = vadd.f32 %v201, %v374
        %376 = vst.msk [vmem:[%s200] sm:$0xff] %vm213, %v375
        %s377 = sand.u32 %s97, 1
        %s378 = scalar_lea.sflag [#allocation4], %s377
        %s379 = sand.u32 %s97, 1
        %s380 = smul.addr %s379, 8
        %s381 = scalar_lea.vmem [#allocation7], %s380
        // Predicated region
        $region41: #{tpu_custom_call.1} parent=31 // pred_check
          %p382 = pneg %p107
        $region42: #{tpu_custom_call.1} parent=31 // pred_check_branch
          %384 = sbr.rel (%p382) target = $region44
        $region43: #{tpu_custom_call.1} parent=31 // pred_region
          %s386 = ssub.s32 128, 128
          %387 = vsyncadd %s378, %s386
          %s388 = smul.addr %s21, 128
          %s389 = scalar_lea.hbm %s3, %s388
          %s391 = sshll.u32 %s381, 4
          %s392 = int_to_ptr.vmem [resolvable:$true] %s391
          %394 = dma.vmem_to_hbm [thread:$0]  %s392, 128, %s389, %s378
        $region44: #{tpu_custom_call.1} parent=31 // pred_fallthru
          _
      $region32: #{tpu_custom_call.1} parent=5 // pred_fallthru
        _
      %p395 = scmp.le.s32.totalorder 2, %s16
      // Predicated region
      $region45: #{tpu_custom_call.1} parent=5 // pred_check
        %p396 = pneg %p395
      $region46: #{tpu_custom_call.1} parent=5 // pred_check_branch
        %398 = sbr.rel (%p396) target = $region48
      $region47: #{tpu_custom_call.1} parent=5 // pred_region
        %s399 = ssub.s32 %s16, 2
        // Predicated region
        $region49: #{tpu_custom_call.1} parent=47 // pred_check
          %p400 = pneg %p113
        $region50: #{tpu_custom_call.1} parent=47 // pred_check_branch
          %402 = sbr.rel (%p400) target = $region52
        $region51: #{tpu_custom_call.1} parent=47 // pred_region
          %s403 = sand.u32 %s98, 1
          %s404 = scalar_lea.sflag [#allocation4], %s403
          %s405 = sand.u32 %s98, 1
          %s406 = smul.addr %s405, 8
          %s407 = scalar_lea.vmem [#allocation7], %s406
          %408 = dma.done %s404, 128
        $region52: #{tpu_custom_call.1} parent=47 // pred_fallthru
          _
      $region48: #{tpu_custom_call.1} parent=5 // pred_fallthru
        _
    $region6: #{tpu_custom_call.1} parent=1 // loop_footer
      %s20 = sadd.s32 1, %s16
    $region7: #{tpu_custom_call.1} parent=1 // loop_footer_branch
      %15 = sbr.rel target = $region3
    $region8: #{tpu_custom_call.1} parent=1 // loop_exit
      _
    %409 = vsyncpa [#allocation3], 1
    %s410 = scalar_lea.sflag [#allocation3], 1
    %411 = vsyncpa %s410, 1
    %412 = vsyncpa [#allocation6], 1
    %413 = vsyncpa [#allocation4], 1
    %s414 = scalar_lea.sflag [#allocation4], 1
    %415 = vsyncpa %s414, 1

</llo_original>
